<compile_context>
chip_gen: v5e
topology: v5e:2x2
jax: 0.10.0
libtpu: 0.0.40
codegen_flags: <defaults>
</compile_context>

<pallas_src>
import functools

import jax
import jax.numpy as jnp
from jax.experimental import pallas as pl
from jax.experimental.pallas import tpu as pltpu


def _round_up(x, m):
    return ((x + m - 1) // m) * m


# ---------------------------------------------------------------------------
# weight prep glue: torch OIHW -> (Cout_pad, 9*Cin_pad) matmul matrix
# column order: (dy*3 + dx)*Cin_pad + cin  (matches in-kernel tap-major im2col)
# ---------------------------------------------------------------------------
def _prep_weight(w_oihw, cin_pad, cout_pad):
    cout, cin, kh, kw = w_oihw.shape
    w = jnp.transpose(w_oihw, (0, 2, 3, 1))                       # (O, KH, KW, I)
    w = jnp.pad(w, ((0, cout_pad - cout), (0, 0), (0, 0), (0, cin_pad - cin)))
    return w.reshape(cout_pad, kh * kw * cin_pad).astype(jnp.float32)


# ---------------------------------------------------------------------------
# fused kernel: one batch element per grid step
# ---------------------------------------------------------------------------
def _conv_block_kernel(x_ref, w1_ref, w2_ref, mask_ref, o_ref, pad2_ref, *,
                       H, W, mxu_dtype):
    # x_ref   : (1, Cinp, L)   flattened zero-padded input, row stride Wp, L = (H+2)*Wp + 2
    # w1_ref  : (Cmid, 9*Cinp) conv1 weights (im2col layout, channels sublane-padded)
    # w2_ref  : (Cout, 9*Cmid) conv2 weights
    # mask_ref: (1, H*Wp)      1.0 where intra-row column < W (valid pixel), else 0.0
    # o_ref   : (1, Cout, H*Wp) lane-dense output slab (wrapper drops 2 junk cols/row)
    # pad2_ref: VMEM (Cmid, L) flat zero-padded stage-1 activation scratch
    Wp = W + 2
    HWp = H * Wp
    L = pad2_ref.shape[1]
    Cmid = pad2_ref.shape[0]
    mask = mask_ref[...]                                          # (1, HWp)
    inv_cnt = 1.0 / float(H * W)

    def conv3x3_in_lrelu(xflat, w_mat):
        # xflat: (C, L) flat padded image.  Each 3x3 tap is a contiguous lane slice.
        cols = [xflat[:, dy * Wp + dx: dy * Wp + dx + HWp]
                for dy in range(3) for dx in range(3)]
        col = jnp.concatenate(cols, axis=0)                       # (9C, HWp)
        acc = jnp.dot(w_mat.astype(mxu_dtype), col.astype(mxu_dtype),
                      preferred_element_type=jnp.float32)         # (Co, HWp) f32
        # InstanceNorm2d (affine=False, eps=1e-5): masked one-pass sum / sum-of-squares.
        mean = jnp.sum(acc * mask, axis=1, keepdims=True) * inv_cnt
        var = jnp.sum(acc * acc * mask, axis=1, keepdims=True) * inv_cnt - mean * mean
        var = jnp.maximum(var, 0.0)                               # guard fp cancellation
        y = (acc - mean) * jax.lax.rsqrt(var + 1e-5)
        y = jnp.where(y >= 0.0, y, 0.01 * y)                      # LeakyReLU(0.01)
        return y * mask                                           # zero the junk columns

    # ---- stage 1: conv(in_c -> out_c) + IN + LReLU (input padded by the wrapper) ----
    y1 = conv3x3_in_lrelu(x_ref[0], w1_ref[...])                  # (Cmid, HWp)

    # ---- stage 2: rebuild padded image in VMEM with one shifted store + tiny halo zero ----
    lo = Wp + 1                                                   # interior start in flat coords
    pad2_ref[:, 0:lo] = jnp.zeros((Cmid, lo), jnp.float32)        # top row + (1,0)
    pad2_ref[:, lo + HWp:L] = jnp.zeros((Cmid, L - lo - HWp), jnp.float32)  # bottom tail
    pad2_ref[:, lo:lo + HWp] = y1                                 # masked junk cols land on halo as 0
    y2 = conv3x3_in_lrelu(pad2_ref[...], w2_ref[...])             # (Cout, HWp)

    o_ref[0] = y2.astype(o_ref.dtype)


# ---------------------------------------------------------------------------
# wrapper
# ---------------------------------------------------------------------------
def conv_block_forward(x_nchw, w1_oihw, w2_oihw, use_bf16_matmul=False):
    """Pallas equivalent of ConvBlock(in_c, out_c).forward(x). x is NCHW float32."""
    N, Cin, H, W = x_nchw.shape
    Cout = w1_oihw.shape[0]
    Hp, Wp = H + 2, W + 2
    HWp = H * Wp
    L = Hp * Wp + 2                      # +2 so the (dy=2,dx=2) tap slice stays in bounds
    Cinp = _round_up(Cin, 8)             # sublane-tile aligned channel counts
    Cmid = _round_up(Cout, 8)

    # zero-pad spatially (and channels up to Cinp) in the wrapper, flatten row-major.
    x = x_nchw.astype(jnp.float32)
    xpad = jnp.pad(x, ((0, 0), (0, Cinp - Cin), (1, 1), (1, 1)))  # (N, Cinp, Hp, Wp)
    xflat = jnp.pad(xpad.reshape(N, Cinp, Hp * Wp), ((0, 0), (0, 0), (0, 2)))  # (N, Cinp, L)

    w1 = _prep_weight(w1_oihw, Cinp, Cmid)                        # (Cmid, 9*Cinp)
    w2 = _prep_weight(w2_oihw, Cmid, Cout)                        # (Cout, 9*Cmid)

    # validity mask over the flattened (H, Wp) grid: 1.0 for intra-row col < W.
    mask = (jnp.arange(HWp, dtype=jnp.int32) % Wp < W).astype(jnp.float32)[None, :]

    kernel = functools.partial(
        _conv_block_kernel, H=H, W=W,
        mxu_dtype=jnp.bfloat16 if use_bf16_matmul else jnp.float32)

    # scoped-VMEM bound from actual (double-buffered) buffer sizes, with margin.
    fp = 4
    est = fp * (
        2 * (Cinp * L + Cmid * 9 * Cinp + Cout * 9 * Cmid + HWp)  # double-buffered inputs
        + 2 * (Cout * HWp)                                        # double-buffered output
        + Cmid * L                                                # pad2 scratch
        + 9 * Cinp * HWp + 9 * Cmid * HWp                         # im2col value buffers
        + 6 * Cmid * HWp)                                         # acc / IN / LReLU temporaries
    vmem_limit = int(min(max(4 * est, 32 * 1024 * 1024), 96 * 1024 * 1024))

    out_flat = pl.pallas_call(
        kernel,
        out_shape=jax.ShapeDtypeStruct((N, Cout, HWp), jnp.float32),
        grid=(N,),
        in_specs=[
            pl.BlockSpec((1, Cinp, L), lambda n: (n, 0, 0)),
            pl.BlockSpec((Cmid, 9 * Cinp), lambda n: (0, 0)),
            pl.BlockSpec((Cout, 9 * Cmid), lambda n: (0, 0)),
            pl.BlockSpec((1, HWp), lambda n: (0, 0)),
        ],
        out_specs=pl.BlockSpec((1, Cout, HWp), lambda n: (n, 0, 0)),
        scratch_shapes=[pltpu.VMEM((Cmid, L), jnp.float32)],
        compiler_params=pltpu.CompilerParams(
            dimension_semantics=("parallel",),
            vmem_limit_bytes=vmem_limit),
    )(xflat, w1, w2, mask)

    # (N, Cout, H, Wp) -> drop the 2 junk columns per row; already NCHW, no transpose.
    return out_flat.reshape(N, Cout, H, Wp)[:, :, :, :W]


# ---------------------------------------------------------------------------
# pure-JAX reference (mirrors the PyTorch module)
# ---------------------------------------------------------------------------
def _conv_block_reference(x_nchw, w1_oihw, w2_oihw):
    def stage(x, w):
        y = jax.lax.conv_general_dilated(
            x, w, window_strides=(1, 1), padding=((1, 1), (1, 1)),
            dimension_numbers=("NCHW", "OIHW", "NCHW"),
            precision=jax.lax.Precision.HIGHEST)
        m = jnp.mean(y, axis=(2, 3), keepdims=True)
        v = jnp.mean((y - m) ** 2, axis=(2, 3), keepdims=True)
        y = (y - m) * jax.lax.rsqrt(v + 1e-5)
        return jnp.where(y >= 0.0, y, 0.01 * y)
    return stage(stage(x_nchw, w1_oihw), w2_oihw)


# ---------------------------------------------------------------------------
# main
# ---------------------------------------------------------------------------
if __name__ == "__main__":
    key = jax.random.PRNGKey(0)
    k1, k2, k3 = jax.random.split(key, 3)

    N, in_c, out_c, H, W = 2, 8, 4, 16, 16
    x = jax.random.normal(k1, (N, in_c, H, W), jnp.float32)                    # NCHW
    # torch-layout (OIHW) conv weights; bias=False as in the module
    w1 = 0.1 * jax.random.normal(k2, (out_c, in_c, 3, 3), jnp.float32)
    w2 = 0.1 * jax.random.normal(k3, (out_c, out_c, 3, 3), jnp.float32)

    out = conv_block_forward(x, w1, w2)
    out = jax.block_until_ready(out)

    assert out.shape == (N, out_c, H, W), out.shape
    assert bool(jnp.all(jnp.isfinite(out)))

    ref = _conv_block_reference(x, w1, w2)
    max_err = float(jnp.max(jnp.abs(out - ref)))
    assert max_err < 5e-3, f"mismatch vs reference: {max_err}"

    print("KERNEL_OK")
</pallas_src>

<mosaic_0001>
module attributes {stable_mosaic.version = 11 : i64} {
  func.func @_conv_block_kernel(%arg0: i32, %arg1: memref<1x8x326xf32, #tpu.memory_space<vmem>>, %arg2: memref<8x72xf32, #tpu.memory_space<vmem>>, %arg3: memref<4x72xf32, #tpu.memory_space<vmem>>, %arg4: memref<1x288xf32, #tpu.memory_space<vmem>>, %arg5: memref<1x4x288xf32, #tpu.memory_space<vmem>>, %arg6: memref<8x326xf32, #tpu.memory_space<vmem>>) attributes {dimension_semantics = [#tpu.dimension_semantics<parallel>], iteration_bounds = array<i64: 2>, scalar_prefetch = 0 : i64, scratch_operands = 1 : i64, tpu.core_type = #tpu.core_type<tc>, window_params = [{transform_indices = @transform_0, window_bounds = array<i64: 1, 8, 326>}, {pipeline_mode = #tpu.pipeline_mode<synchronous>, transform_indices = @transform_1, window_bounds = array<i64: 8, 72>}, {pipeline_mode = #tpu.pipeline_mode<synchronous>, transform_indices = @transform_2, window_bounds = array<i64: 4, 72>}, {pipeline_mode = #tpu.pipeline_mode<synchronous>, transform_indices = @transform_3, window_bounds = array<i64: 1, 288>}, {transform_indices = @transform_4, window_bounds = array<i64: 1, 4, 288>}]} {
    %c0 = arith.constant 0 : index
    %c0_0 = arith.constant 0 : index
    %0 = vector.load %arg4[%c0, %c0_0] : memref<1x288xf32, #tpu.memory_space<vmem>>, vector<1x288xf32>
    %c0_1 = arith.constant 0 : index
    %c0_2 = arith.constant 0 : index
    %c0_3 = arith.constant 0 : index
    %1 = vector.load %arg1[%c0_1, %c0_2, %c0_3] : memref<1x8x326xf32, #tpu.memory_space<vmem>>, vector<1x8x326xf32>
    %2 = vector.shape_cast %1 : vector<1x8x326xf32> to vector<8x326xf32>
    %c0_4 = arith.constant 0 : index
    %c0_5 = arith.constant 0 : index
    %3 = vector.load %arg2[%c0_4, %c0_5] : memref<8x72xf32, #tpu.memory_space<vmem>>, vector<8x72xf32>
    %4 = vector.extract_strided_slice %2 {offsets = [0, 0], sizes = [8, 288], strides = [1, 1]} : vector<8x326xf32> to vector<8x288xf32>
    %5 = vector.extract_strided_slice %2 {offsets = [0, 1], sizes = [8, 288], strides = [1, 1]} : vector<8x326xf32> to vector<8x288xf32>
    %6 = vector.extract_strided_slice %2 {offsets = [0, 2], sizes = [8, 288], strides = [1, 1]} : vector<8x326xf32> to vector<8x288xf32>
    %7 = vector.extract_strided_slice %2 {offsets = [0, 18], sizes = [8, 288], strides = [1, 1]} : vector<8x326xf32> to vector<8x288xf32>
    %8 = vector.extract_strided_slice %2 {offsets = [0, 19], sizes = [8, 288], strides = [1, 1]} : vector<8x326xf32> to vector<8x288xf32>
    %9 = vector.extract_strided_slice %2 {offsets = [0, 20], sizes = [8, 288], strides = [1, 1]} : vector<8x326xf32> to vector<8x288xf32>
    %10 = vector.extract_strided_slice %2 {offsets = [0, 36], sizes = [8, 288], strides = [1, 1]} : vector<8x326xf32> to vector<8x288xf32>
    %11 = vector.extract_strided_slice %2 {offsets = [0, 37], sizes = [8, 288], strides = [1, 1]} : vector<8x326xf32> to vector<8x288xf32>
    %12 = vector.extract_strided_slice %2 {offsets = [0, 38], sizes = [8, 288], strides = [1, 1]} : vector<8x326xf32> to vector<8x288xf32>
    %13 = tpu.concatenate %4, %5, %6, %7, %8, %9, %10, %11, %12 in 0 : vector<8x288xf32>, vector<8x288xf32>, vector<8x288xf32>, vector<8x288xf32>, vector<8x288xf32>, vector<8x288xf32>, vector<8x288xf32>, vector<8x288xf32>, vector<8x288xf32> -> vector<72x288xf32>
    %cst = arith.constant dense<0.000000e+00> : vector<8x288xf32>
    %14 = tpu.matmul %3, %13, %cst {dimension_numbers = #tpu.dot_dimension_numbers<[1], [0], [0], [1], [0, 0, 1, 1], [], []>} : vector<8x72xf32>, vector<72x288xf32>, vector<8x288xf32> -> vector<8x288xf32>
    %15 = vector.broadcast %0 : vector<1x288xf32> to vector<8x288xf32>
    %16 = arith.mulf %14, %15 : vector<8x288xf32>
    %cst_6 = arith.constant dense<0.000000e+00> : vector<8xf32>
    %17 = vector.multi_reduction <add>, %16, %cst_6 [1] : vector<8x288xf32> to vector<8xf32>
    %18 = vector.shape_cast %17 : vector<8xf32> to vector<8x1xf32>
    %cst_7 = arith.constant 3.906250e-03 : f32
    %19 = vector.broadcast %cst_7 : f32 to vector<8x1xf32>
    %20 = arith.mulf %18, %19 : vector<8x1xf32>
    %21 = arith.mulf %14, %14 : vector<8x288xf32>
    %22 = vector.broadcast %0 : vector<1x288xf32> to vector<8x288xf32>
    %23 = arith.mulf %21, %22 : vector<8x288xf32>
    %cst_8 = arith.constant dense<0.000000e+00> : vector<8xf32>
    %24 = vector.multi_reduction <add>, %23, %cst_8 [1] : vector<8x288xf32> to vector<8xf32>
    %25 = vector.shape_cast %24 : vector<8xf32> to vector<8x1xf32>
    %cst_9 = arith.constant 3.906250e-03 : f32
    %26 = vector.broadcast %cst_9 : f32 to vector<8x1xf32>
    %27 = arith.mulf %25, %26 : vector<8x1xf32>
    %28 = arith.mulf %20, %20 : vector<8x1xf32>
    %29 = arith.subf %27, %28 : vector<8x1xf32>
    %cst_10 = arith.constant 0.000000e+00 : f32
    %30 = vector.broadcast %cst_10 : f32 to vector<8x1xf32>
    %31 = arith.maximumf %29, %30 : vector<8x1xf32>
    %32 = vector.broadcast %20 : vector<8x1xf32> to vector<8x288xf32>
    %33 = arith.subf %14, %32 : vector<8x288xf32>
    %cst_11 = arith.constant 9.99999974E-6 : f32
    %34 = vector.broadcast %cst_11 : f32 to vector<8x1xf32>
    %35 = arith.addf %31, %34 : vector<8x1xf32>
    %36 = math.rsqrt %35 : vector<8x1xf32>
    %37 = vector.broadcast %36 : vector<8x1xf32> to vector<8x288xf32>
    %38 = arith.mulf %33, %37 : vector<8x288xf32>
    %cst_12 = arith.constant 0.000000e+00 : f32
    %39 = vector.broadcast %cst_12 : f32 to vector<8x288xf32>
    %40 = arith.cmpf oge, %38, %39 : vector<8x288xf32>
    %cst_13 = arith.constant 0.00999999977 : f32
    %41 = vector.broadcast %cst_13 : f32 to vector<8x288xf32>
    %42 = arith.mulf %41, %38 : vector<8x288xf32>
    %43 = arith.select %40, %38, %42 : vector<8x288xi1>, vector<8x288xf32>
    %44 = vector.broadcast %0 : vector<1x288xf32> to vector<8x288xf32>
    %45 = arith.mulf %43, %44 : vector<8x288xf32>
    %cst_14 = arith.constant 0.000000e+00 : f32
    %46 = vector.broadcast %cst_14 : f32 to vector<8x19xf32>
    %c0_15 = arith.constant 0 : index
    %c0_16 = arith.constant 0 : index
    %47 = vector.load %arg6[%c0_15, %c0_16] : memref<8x326xf32, #tpu.memory_space<vmem>>, vector<8x19xf32>
    tpu.vector_store %arg6[%c0_15, %c0_16], %46 {strides = array<i32>} : memref<8x326xf32, #tpu.memory_space<vmem>>, vector<8x19xf32>,
    %cst_17 = arith.constant 0.000000e+00 : f32
    %48 = vector.broadcast %cst_17 : f32 to vector<8x19xf32>
    %c0_18 = arith.constant 0 : index
    %c307 = arith.constant 307 : index
    %49 = vector.load %arg6[%c0_18, %c307] : memref<8x326xf32, #tpu.memory_space<vmem>>, vector<8x19xf32>
    tpu.vector_store %arg6[%c0_18, %c307], %48 {strides = array<i32>} : memref<8x326xf32, #tpu.memory_space<vmem>>, vector<8x19xf32>,
    %c0_19 = arith.constant 0 : index
    %c19 = arith.constant 19 : index
    %50 = vector.load %arg6[%c0_19, %c19] : memref<8x326xf32, #tpu.memory_space<vmem>>, vector<8x288xf32>
    tpu.vector_store %arg6[%c0_19, %c19], %45 {strides = array<i32>} : memref<8x326xf32, #tpu.memory_space<vmem>>, vector<8x288xf32>,
    %c0_20 = arith.constant 0 : index
    %c0_21 = arith.constant 0 : index
    %51 = vector.load %arg6[%c0_20, %c0_21] : memref<8x326xf32, #tpu.memory_space<vmem>>, vector<8x326xf32>
    %c0_22 = arith.constant 0 : index
    %c0_23 = arith.constant 0 : index
    %52 = vector.load %arg3[%c0_22, %c0_23] : memref<4x72xf32, #tpu.memory_space<vmem>>, vector<4x72xf32>
    %53 = vector.extract_strided_slice %51 {offsets = [0, 0], sizes = [8, 288], strides = [1, 1]} : vector<8x326xf32> to vector<8x288xf32>
    %54 = vector.extract_strided_slice %51 {offsets = [0, 1], sizes = [8, 288], strides = [1, 1]} : vector<8x326xf32> to vector<8x288xf32>
    %55 = vector.extract_strided_slice %51 {offsets = [0, 2], sizes = [8, 288], strides = [1, 1]} : vector<8x326xf32> to vector<8x288xf32>
    %56 = vector.extract_strided_slice %51 {offsets = [0, 18], sizes = [8, 288], strides = [1, 1]} : vector<8x326xf32> to vector<8x288xf32>
    %57 = vector.extract_strided_slice %51 {offsets = [0, 19], sizes = [8, 288], strides = [1, 1]} : vector<8x326xf32> to vector<8x288xf32>
    %58 = vector.extract_strided_slice %51 {offsets = [0, 20], sizes = [8, 288], strides = [1, 1]} : vector<8x326xf32> to vector<8x288xf32>
    %59 = vector.extract_strided_slice %51 {offsets = [0, 36], sizes = [8, 288], strides = [1, 1]} : vector<8x326xf32> to vector<8x288xf32>
    %60 = vector.extract_strided_slice %51 {offsets = [0, 37], sizes = [8, 288], strides = [1, 1]} : vector<8x326xf32> to vector<8x288xf32>
    %61 = vector.extract_strided_slice %51 {offsets = [0, 38], sizes = [8, 288], strides = [1, 1]} : vector<8x326xf32> to vector<8x288xf32>
    %62 = tpu.concatenate %53, %54, %55, %56, %57, %58, %59, %60, %61 in 0 : vector<8x288xf32>, vector<8x288xf32>, vector<8x288xf32>, vector<8x288xf32>, vector<8x288xf32>, vector<8x288xf32>, vector<8x288xf32>, vector<8x288xf32>, vector<8x288xf32> -> vector<72x288xf32>
    %cst_24 = arith.constant dense<0.000000e+00> : vector<4x288xf32>
    %63 = tpu.matmul %52, %62, %cst_24 {dimension_numbers = #tpu.dot_dimension_numbers<[1], [0], [0], [1], [0, 0, 1, 1], [], []>} : vector<4x72xf32>, vector<72x288xf32>, vector<4x288xf32> -> vector<4x288xf32>
    %64 = vector.broadcast %0 : vector<1x288xf32> to vector<4x288xf32>
    %65 = arith.mulf %63, %64 : vector<4x288xf32>
    %cst_25 = arith.constant dense<0.000000e+00> : vector<4xf32>
    %66 = vector.multi_reduction <add>, %65, %cst_25 [1] : vector<4x288xf32> to vector<4xf32>
    %67 = vector.shape_cast %66 : vector<4xf32> to vector<4x1xf32>
    %cst_26 = arith.constant 3.906250e-03 : f32
    %68 = vector.broadcast %cst_26 : f32 to vector<4x1xf32>
    %69 = arith.mulf %67, %68 : vector<4x1xf32>
    %70 = arith.mulf %63, %63 : vector<4x288xf32>
    %71 = vector.broadcast %0 : vector<1x288xf32> to vector<4x288xf32>
    %72 = arith.mulf %70, %71 : vector<4x288xf32>
    %cst_27 = arith.constant dense<0.000000e+00> : vector<4xf32>
    %73 = vector.multi_reduction <add>, %72, %cst_27 [1] : vector<4x288xf32> to vector<4xf32>
    %74 = vector.shape_cast %73 : vector<4xf32> to vector<4x1xf32>
    %cst_28 = arith.constant 3.906250e-03 : f32
    %75 = vector.broadcast %cst_28 : f32 to vector<4x1xf32>
    %76 = arith.mulf %74, %75 : vector<4x1xf32>
    %77 = arith.mulf %69, %69 : vector<4x1xf32>
    %78 = arith.subf %76, %77 : vector<4x1xf32>
    %cst_29 = arith.constant 0.000000e+00 : f32
    %79 = vector.broadcast %cst_29 : f32 to vector<4x1xf32>
    %80 = arith.maximumf %78, %79 : vector<4x1xf32>
    %81 = vector.broadcast %69 : vector<4x1xf32> to vector<4x288xf32>
    %82 = arith.subf %63, %81 : vector<4x288xf32>
    %cst_30 = arith.constant 9.99999974E-6 : f32
    %83 = vector.broadcast %cst_30 : f32 to vector<4x1xf32>
    %84 = arith.addf %80, %83 : vector<4x1xf32>
    %85 = math.rsqrt %84 : vector<4x1xf32>
    %86 = vector.broadcast %85 : vector<4x1xf32> to vector<4x288xf32>
    %87 = arith.mulf %82, %86 : vector<4x288xf32>
    %cst_31 = arith.constant 0.000000e+00 : f32
    %88 = vector.broadcast %cst_31 : f32 to vector<4x288xf32>
    %89 = arith.cmpf oge, %87, %88 : vector<4x288xf32>
    %cst_32 = arith.constant 0.00999999977 : f32
    %90 = vector.broadcast %cst_32 : f32 to vector<4x288xf32>
    %91 = arith.mulf %90, %87 : vector<4x288xf32>
    %92 = arith.select %89, %87, %91 : vector<4x288xi1>, vector<4x288xf32>
    %93 = vector.broadcast %0 : vector<1x288xf32> to vector<4x288xf32>
    %94 = arith.mulf %92, %93 : vector<4x288xf32>
    %c0_33 = arith.constant 0 : index
    %c0_34 = arith.constant 0 : index
    %c0_35 = arith.constant 0 : index
    %95 = vector.load %arg5[%c0_33, %c0_34, %c0_35] : memref<1x4x288xf32, #tpu.memory_space<vmem>>, vector<1x4x288xf32>
    %96 = vector.shape_cast %95 : vector<1x4x288xf32> to vector<4x288xf32>
    %97 = vector.shape_cast %94 : vector<4x288xf32> to vector<1x4x288xf32>
    tpu.vector_store %arg5[%c0_33, %c0_34, %c0_35], %97 {strides = array<i32>} : memref<1x4x288xf32, #tpu.memory_space<vmem>>, vector<1x4x288xf32>,
    return
  }
  func.func @transform_0(%arg0: i32) -> (i32, i32, i32) {
    %c0_i32 = arith.constant 0 : i32
    %c0_i32_0 = arith.constant 0 : i32
    %c0_i32_1 = arith.constant 0 : i32
    return %arg0, %c0_i32, %c0_i32_0 : i32, i32, i32
  }
  func.func @transform_1(%arg0: i32) -> (i32, i32) {
    %c0_i32 = arith.constant 0 : i32
    %c0_i32_0 = arith.constant 0 : i32
    %c0_i32_1 = arith.constant 0 : i32
    return %c0_i32, %c0_i32_0 : i32, i32
  }
  func.func @transform_2(%arg0: i32) -> (i32, i32) {
    %c0_i32 = arith.constant 0 : i32
    %c0_i32_0 = arith.constant 0 : i32
    %c0_i32_1 = arith.constant 0 : i32
    return %c0_i32, %c0_i32_0 : i32, i32
  }
  func.func @transform_3(%arg0: i32) -> (i32, i32) {
    %c0_i32 = arith.constant 0 : i32
    %c0_i32_0 = arith.constant 0 : i32
    %c0_i32_1 = arith.constant 0 : i32
    return %c0_i32, %c0_i32_0 : i32, i32
  }
  func.func @transform_4(%arg0: i32) -> (i32, i32, i32) {
    %c0_i32 = arith.constant 0 : i32
    %c0_i32_0 = arith.constant 0 : i32
    %c0_i32_1 = arith.constant 0 : i32
    return %arg0, %c0_i32, %c0_i32_0 : i32, i32, i32
  }
}

</mosaic_0001>

<llo_original>
// kernel: tpu_custom_call.1
$region0: #{tpu_custom_call.1}
  #allocation0 [shape = 'u32[]', space=smem, size = 0x4, offset = 0x4, fixed_abs, tag = 'smem constant byte address 0x4 - core index']
  #allocation1 [shape = 'u32[72,128]{1,0:T(1,128)}', space=vmem, size = 0x9000, scoped, tag = 'internal scratch']
  #allocation2 [shape = 'f32[8,326]{1,0:T(8,128)}', space=vmem, size = 0x3000, scoped, tag = 'scratch operand']
  %s0 = inlined_call_operand.hbm [shape: f32[2,8,326], index: 0, kind: input, shape index: {}]
  %s1 = inlined_call_operand.hbm [shape: f32[8,72], index: 1, kind: input, shape index: {}]
  %s2 = inlined_call_operand.hbm [shape: f32[4,72], index: 2, kind: input, shape index: {}]
  %s3 = inlined_call_operand.hbm [shape: f32[1,288], index: 3, kind: input, shape index: {}]
  %s4 = inlined_call_operand.hbm [shape: f32[2,4,288], index: 4, kind: output, shape index: {}]
  %s5 = sld [smem:[#allocation0]]
  $region65: #{tpu_custom_call.1} parent=0
    _
  %s7 = ssub.s32 1, %s5
  %s8 = scalar_select 0, %s7, %s5
  $region1: #{tpu_custom_call.1} parent=0
    #allocation3 [shape = 'u8[24576]{0}', space=vmem, size = 0x6000, scoped, tag = 'input window, operand 0']
    #allocation4 [shape = 's32[2]{0}', space=sflag, size = 0x8, scoped, tag = 'scoped memory for tpu_custom_call.1']
    #allocation5 [shape = 's32[2]{0}', space=sflag, size = 0x8, scoped, tag = 'scoped memory for tpu_custom_call.1']
    #allocation6 [shape = 'u8[4096]{0}', space=vmem, size = 0x1000, scoped, tag = 'input window, operand 1, single buffered']
    #allocation7 [shape = 's32[1]{0}', space=sflag, size = 0x4, scoped, tag = 'scoped memory for tpu_custom_call.1']
    #allocation8 [shape = 'u8[2048]{0}', space=vmem, size = 0x800, scoped, tag = 'input window, operand 2, single buffered']
    #allocation9 [shape = 'u8[1536]{0}', space=vmem, size = 0x800, scoped, tag = 'input window, operand 3, single buffered']
    #allocation10 [shape = 's32[1]{0}', space=sflag, size = 0x4, scoped, tag = 'scoped memory for tpu_custom_call.1']
    #allocation11 [shape = 'u8[12288]{0}', space=vmem, size = 0x3000, scoped, tag = 'output window, operand 0']
    %9 = vsyncpa [#allocation4], 0
    %s10 = scalar_lea.sflag [#allocation4], 1
    %11 = vsyncpa %s10, 0
    %12 = vsyncpa [#allocation7], 0
    %13 = vsyncpa [#allocation10], 0
    %14 = vsyncpa [#allocation5], 0
    %s15 = scalar_lea.sflag [#allocation5], 1
    %16 = vsyncpa %s15, 0
    loop: start=0, step=1, limit=4
    $region2: #{tpu_custom_call.1} parent=1 // loop_pre_header
      _
    $region3: #{tpu_custom_call.1} parent=1 // loop_header
      %s18 = sphi 0, %s22
      %p19 = scmp.ge.s32.totalorder %s18, 4
      %s28 = sphi 0, %s30
      %s31 = sphi 0, %s28
      %s32 = sphi 0, %s31
      %s48 = sphi 0, %s32
      %s52 = sphi 0, %s52
      %s54 = sphi 0, %s52
      %s55 = sphi 0, %s54
      %s69 = sphi 0, %s55
      %s73 = sphi 0, %s73
      %s75 = sphi 0, %s73
      %s76 = sphi 0, %s75
      %s90 = sphi 0, %s76
      %s94 = sphi 0, %s94
      %s96 = sphi 0, %s94
      %s97 = sphi 0, %s96
      %s111 = sphi 0, %s97
      %s117 = sphi 0, %s119
      %s120 = sphi 0, %s117
      %s121 = sphi 0, %s120
      %s137 = sphi 0, %s121
    $region4: #{tpu_custom_call.1} parent=1 // loop_header_branch
      %21 = sbr.rel (%p19) target = $region8
    $region5: #{tpu_custom_call.1} parent=1 // loop_body
      %s23 = ssub.s32 %s18, 1
      %s24 = ssub.s32 %s18, 2
      %s25 = sadd.s32 %s18, 1
      %s26 = ssub.s32 %s18, %s25
      %p27 = scmp.eq.s32.totalorder %s26, 0
      %s29 = sadd.s32 %s28, 1
      %s30 = scalar_select %p27, %s28, %s29
      %p33 = pneg %p27
      %p34 = scmp.eq.s32.totalorder %s18, 1
      %p35 = por %p33, %p34
      %p36 = scmp.ne.s32.totalorder %s28, %s31
      %p37 = scmp.eq.s32.totalorder %s18, 0
      %p38 = por %p36, %p37
      %p39 = scmp.ne.s32.totalorder %s28, %s31
      %p40 = scmp.eq.s32.totalorder %s23, 1
      %p41 = por %p39, %p40
      %p42 = scmp.ne.s32.totalorder %s31, %s32
      %p43 = scmp.eq.s32.totalorder %s23, 0
      %p44 = por %p42, %p43
      %p45 = scmp.ne.s32.totalorder %s31, %s32
      %p46 = scmp.eq.s32.totalorder %s24, 1
      %p47 = por %p45, %p46
      %p49 = scmp.ne.s32.totalorder %s32, %s48
      %p50 = scmp.eq.s32.totalorder %s24, 0
      %p51 = por %p49, %p50
      %s53 = sadd.s32 %s52, 1
      %p56 = scmp.eq.s32.totalorder %s18, 1
      %p57 = scmp.ne.s32.totalorder %s52, %s54
      %p58 = scmp.eq.s32.totalorder %s18, 0
      %p59 = por %p57, %p58
      %p60 = scmp.ne.s32.totalorder %s52, %s54
      %p61 = scmp.eq.s32.totalorder %s23, 1
      %p62 = por %p60, %p61
      %p63 = scmp.ne.s32.totalorder %s54, %s55
      %p64 = scmp.eq.s32.totalorder %s23, 0
      %p65 = por %p63, %p64
      %p66 = scmp.ne.s32.totalorder %s54, %s55
      %p67 = scmp.eq.s32.totalorder %s24, 1
      %p68 = por %p66, %p67
      %p70 = scmp.ne.s32.totalorder %s55, %s69
      %p71 = scmp.eq.s32.totalorder %s24, 0
      %p72 = por %p70, %p71
      %s74 = sadd.s32 %s73, 1
      %p77 = scmp.eq.s32.totalorder %s18, 1
      %p78 = scmp.ne.s32.totalorder %s73, %s75
      %p79 = scmp.eq.s32.totalorder %s18, 0
      %p80 = por %p78, %p79
      %p81 = scmp.ne.s32.totalorder %s73, %s75
      %p82 = scmp.eq.s32.totalorder %s23, 1
      %p83 = por %p81, %p82
      %p84 = scmp.ne.s32.totalorder %s75, %s76
      %p85 = scmp.eq.s32.totalorder %s23, 0
      %p86 = por %p84, %p85
      %p87 = scmp.ne.s32.totalorder %s75, %s76
      %p88 = scmp.eq.s32.totalorder %s24, 1
      %p89 = por %p87, %p88
      %p91 = scmp.ne.s32.totalorder %s76, %s90
      %p92 = scmp.eq.s32.totalorder %s24, 0
      %p93 = por %p91, %p92
      %s95 = sadd.s32 %s94, 1
      %p98 = scmp.eq.s32.totalorder %s18, 1
      %p99 = scmp.ne.s32.totalorder %s94, %s96
      %p100 = scmp.eq.s32.totalorder %s18, 0
      %p101 = por %p99, %p100
      %p102 = scmp.ne.s32.totalorder %s94, %s96
      %p103 = scmp.eq.s32.totalorder %s23, 1
      %p104 = por %p102, %p103
      %p105 = scmp.ne.s32.totalorder %s96, %s97
      %p106 = scmp.eq.s32.totalorder %s23, 0
      %p107 = por %p105, %p106
      %p108 = scmp.ne.s32.totalorder %s96, %s97
      %p109 = scmp.eq.s32.totalorder %s24, 1
      %p110 = por %p108, %p109
      %p112 = scmp.ne.s32.totalorder %s97, %s111
      %p113 = scmp.eq.s32.totalorder %s24, 0
      %p114 = por %p112, %p113
      %s115 = ssub.s32 %s18, %s25
      %p116 = scmp.eq.s32.totalorder %s115, 0
      %s118 = sadd.s32 %s117, 1
      %s119 = scalar_select %p116, %s117, %s118
      %p122 = pneg %p116
      %p123 = scmp.eq.s32.totalorder %s18, 1
      %p124 = por %p122, %p123
      %p125 = scmp.ne.s32.totalorder %s117, %s120
      %p126 = scmp.eq.s32.totalorder %s18, 0
      %p127 = por %p125, %p126
      %p128 = scmp.ne.s32.totalorder %s117, %s120
      %p129 = scmp.eq.s32.totalorder %s23, 1
      %p130 = por %p128, %p129
      %p131 = scmp.ne.s32.totalorder %s120, %s121
      %p132 = scmp.eq.s32.totalorder %s23, 0
      %p133 = por %p131, %p132
      %p134 = scmp.ne.s32.totalorder %s120, %s121
      %p135 = scmp.eq.s32.totalorder %s24, 1
      %p136 = por %p134, %p135
      %p138 = scmp.ne.s32.totalorder %s121, %s137
      %p139 = scmp.eq.s32.totalorder %s24, 0
      %p140 = por %p138, %p139
      %p141 = scmp.le.s32.totalorder 1, %s18
      %p142 = scmp.lt.s32.totalorder %s18, 3
      %p143 = pnand %p141, %p142
      %p144 = pneg %p143
      // Predicated region
      $region9: #{tpu_custom_call.1} parent=5 // pred_check
        _
      $region10: #{tpu_custom_call.1} parent=5 // pred_check_branch
        %146 = sbr.rel (%p143) target = $region12
      $region11: #{tpu_custom_call.1} parent=5 // pred_region
        %s147 = ssub.s32 %s18, 1
        // Predicated region
        $region13: #{tpu_custom_call.1} parent=11 // pred_check
          %p148 = pneg %p65
        $region14: #{tpu_custom_call.1} parent=11 // pred_check_branch
          %150 = sbr.rel (%p148) target = $region16
        $region15: #{tpu_custom_call.1} parent=11 // pred_region
          %152 = vsyncadd [#allocation7], 0
          %s154 = sshll.u32 %s1, 4
          %s155 = int_to_ptr.hbm [resolvable:$true] %s154
          %s156 = sshll.u32 [#allocation6], 4
          %s157 = int_to_ptr.vmem [resolvable:$true] %s156
          %159 = dma.hbm_to_vmem [thread:$0]  %s155, 128, %s157, [#allocation7]
        $region16: #{tpu_custom_call.1} parent=11 // pred_fallthru
          _
        // Predicated region
        $region17: #{tpu_custom_call.1} parent=11 // pred_check
          %p160 = pneg %p86
        $region18: #{tpu_custom_call.1} parent=11 // pred_check_branch
          %162 = sbr.rel (%p160) target = $region20
        $region19: #{tpu_custom_call.1} parent=11 // pred_region
          %164 = vsyncadd [#allocation7], 0
          %s166 = sshll.u32 %s2, 4
          %s167 = int_to_ptr.hbm [resolvable:$true] %s166
          %s168 = sshll.u32 [#allocation8], 4
          %s169 = int_to_ptr.vmem [resolvable:$true] %s168
          %171 = dma.hbm_to_vmem [thread:$0]  %s167, 64, %s169, [#allocation7]
        $region20: #{tpu_custom_call.1} parent=11 // pred_fallthru
          _
        // Predicated region
        $region21: #{tpu_custom_call.1} parent=11 // pred_check
          %p172 = pneg %p107
        $region22: #{tpu_custom_call.1} parent=11 // pred_check_branch
          %174 = sbr.rel (%p172) target = $region24
        $region23: #{tpu_custom_call.1} parent=11 // pred_region
          %176 = vsyncadd [#allocation10], 0
          %s178 = sshll.u32 %s3, 4
          %s179 = int_to_ptr.hbm [resolvable:$true] %s178
          %s180 = sshll.u32 [#allocation9], 4
          %s181 = int_to_ptr.vmem [resolvable:$true] %s180
          %183 = dma.hbm_to_vmem [thread:$0]  %s179, 48, %s181, [#allocation10]
        $region24: #{tpu_custom_call.1} parent=11 // pred_fallthru
          _
      $region12: #{tpu_custom_call.1} parent=5 // pred_fallthru
        _
      %p184 = scmp.lt.s32.totalorder %s18, 2
      // Predicated region
      $region25: #{tpu_custom_call.1} parent=5 // pred_check
        %p185 = pneg %p184
      $region26: #{tpu_custom_call.1} parent=5 // pred_check_branch
        %187 = sbr.rel (%p185) target = $region28
      $region27: #{tpu_custom_call.1} parent=5 // pred_region
        // Predicated region
        $region29: #{tpu_custom_call.1} parent=27 // pred_check
          %p188 = pneg %p38
        $region30: #{tpu_custom_call.1} parent=27 // pred_check_branch
          %190 = sbr.rel (%p188) target = $region32
        $region31: #{tpu_custom_call.1} parent=27 // pred_region
          %s191 = sand.u32 %s28, 1
          %s192 = scalar_lea.sflag [#allocation4], %s191
          %s193 = sand.u32 %s28, 1
          %s194 = smul.addr %s193, 24
          %s195 = scalar_lea.vmem [#allocation3], %s194
          %197 = vsyncadd %s192, 0
          %s198 = smul.addr %s18, 3
          %s199 = smul.addr %s198, 8
          %s200 = scalar_lea.hbm %s0, %s199
          %s202 = sshll.u32 %s200, 4
          %s203 = int_to_ptr.hbm [resolvable:$true] %s202
          %s204 = sshll.u32 %s195, 4
          %s205 = int_to_ptr.vmem [resolvable:$true] %s204
          %207 = dma.hbm_to_vmem [thread:$0]  %s203, 384, %s205, %s192
        $region32: #{tpu_custom_call.1} parent=27 // pred_fallthru
          _
      $region28: #{tpu_custom_call.1} parent=5 // pred_fallthru
        _
      %p208 = scmp.le.s32.totalorder 1, %s18
      %p209 = scmp.lt.s32.totalorder %s18, 3
      %p210 = pnand %p208, %p209
      %p211 = pneg %p210
      // Predicated region
      $region33: #{tpu_custom_call.1} parent=5 // pred_check
        _
      $region34: #{tpu_custom_call.1} parent=5 // pred_check_branch
        %213 = sbr.rel (%p210) target = $region36
      $region35: #{tpu_custom_call.1} parent=5 // pred_region
        %s214 = ssub.s32 %s18, 1
        %s215 = sand.u32 %s31, 1
        %s216 = scalar_lea.sflag [#allocation4], %s215
        %s217 = sand.u32 %s31, 1
        %s218 = smul.addr %s217, 24
        %s219 = scalar_lea.vmem [#allocation3], %s218
        // Predicated region
        $region37: #{tpu_custom_call.1} parent=35 // pred_check
          %p220 = pneg %p44
        $region38: #{tpu_custom_call.1} parent=35 // pred_check_branch
          %222 = sbr.rel (%p220) target = $region40
        $region39: #{tpu_custom_call.1} parent=35 // pred_region
          %224 = dma.done %s216, 384
        $region40: #{tpu_custom_call.1} parent=35 // pred_fallthru
          _
        // Predicated region
        $region41: #{tpu_custom_call.1} parent=35 // pred_check
          %p225 = pneg %p65
        $region42: #{tpu_custom_call.1} parent=35 // pred_check_branch
          %227 = sbr.rel (%p225) target = $region44
        $region43: #{tpu_custom_call.1} parent=35 // pred_region
          %229 = dma.done [#allocation7], 128
        $region44: #{tpu_custom_call.1} parent=35 // pred_fallthru
          _
        // Predicated region
        $region45: #{tpu_custom_call.1} parent=35 // pred_check
          %p230 = pneg %p86
        $region46: #{tpu_custom_call.1} parent=35 // pred_check_branch
          %232 = sbr.rel (%p230) target = $region48
        $region47: #{tpu_custom_call.1} parent=35 // pred_region
          %234 = dma.done [#allocation7], 64
        $region48: #{tpu_custom_call.1} parent=35 // pred_fallthru
          _
        // Predicated region
        $region49: #{tpu_custom_call.1} parent=35 // pred_check
          %p235 = pneg %p107
        $region50: #{tpu_custom_call.1} parent=35 // pred_check_branch
          %237 = sbr.rel (%p235) target = $region52
        $region51: #{tpu_custom_call.1} parent=35 // pred_region
          %239 = dma.done [#allocation10], 48
        $region52: #{tpu_custom_call.1} parent=35 // pred_fallthru
          _
        %s240 = sand.u32 %s31, 1
        %s241 = scalar_lea.sflag [#allocation4], %s240
        %s242 = sand.u32 %s31, 1
        %s243 = smul.addr %s242, 24
        %s244 = scalar_lea.vmem [#allocation3], %s243
        %p245 = pneg %p44
        %p246 = pneg %p41
        %p247 = pneg %p65
        %p248 = pneg %p62
        %p249 = pneg %p86
        %p250 = pneg %p83
        %p251 = pneg %p107
        %p252 = pneg %p104
        %p253 = pneg %p133
        %p254 = pneg %p130
        %s255 = sand.u32 %s120, 1
        %s256 = scalar_lea.sflag [#allocation5], %s255
        %s257 = sand.u32 %s120, 1
        %s258 = smul.addr %s257, 12
        %s259 = scalar_lea.vmem [#allocation11], %s258
        %v260 = vld [vmem:[#allocation9] sm:$0x7]
        %v261 = vld [vmem:[%s219] sm:$0xff]
        %v262 = vld [vmem:[%s219 + $0x8] sm:$0xff]
        %v263 = vld [vmem:[%s219 + $0x10] sm:$0xff]
        %v264 = vld [vmem:[#allocation6] sm:$0xff]
        %268 = vrot.lane.b32.xlu0 %v261, 127
        %v269 = vpop.permute.xlu0 %268
        %270 = vrot.lane.b32.xlu0 %v262, 127
        %v271 = vpop.permute.xlu0 %270
        %272 = vrot.lane.b32.xlu0 %v263, 127
        %v273 = vpop.permute.xlu0 %272
        %vm274 = vcmask 1039360
        %v275 = vsel %vm274, %v269, %v271
        %v276 = vsel %vm274, %v271, %v273
        %280 = vrot.lane.b32.xlu0 %v261, 126
        %v281 = vpop.permute.xlu0 %280
        %282 = vrot.lane.b32.xlu0 %v262, 126
        %v283 = vpop.permute.xlu0 %282
        %284 = vrot.lane.b32.xlu0 %v263, 126
        %v285 = vpop.permute.xlu0 %284
        %vm286 = vcmask 1031168
        %v287 = vsel %vm286, %v281, %v283
        %v288 = vsel %vm286, %v283, %v285
        %292 = vrot.lane.b32.xlu0 %v261, 110
        %v293 = vpop.permute.xlu0 %292
        %294 = vrot.lane.b32.xlu0 %v262, 110
        %v295 = vpop.permute.xlu0 %294
        %296 = vrot.lane.b32.xlu0 %v263, 110
        %v297 = vpop.permute.xlu0 %296
        %vm298 = vcmask 900096
        %v299 = vsel %vm298, %v293, %v295
        %v300 = vsel %vm298, %v295, %v297
        %304 = vrot.lane.b32.xlu0 %v261, 109
        %v305 = vpop.permute.xlu0 %304
        %306 = vrot.lane.b32.xlu0 %v262, 109
        %v307 = vpop.permute.xlu0 %306
        %308 = vrot.lane.b32.xlu0 %v263, 109
        %v309 = vpop.permute.xlu0 %308
        %vm310 = vcmask 891904
        %v311 = vsel %vm310, %v305, %v307
        %v312 = vsel %vm310, %v307, %v309
        %316 = vrot.lane.b32.xlu0 %v261, 108
        %v317 = vpop.permute.xlu0 %316
        %318 = vrot.lane.b32.xlu0 %v262, 108
        %v319 = vpop.permute.xlu0 %318
        %320 = vrot.lane.b32.xlu0 %v263, 108
        %v321 = vpop.permute.xlu0 %320
        %vm322 = vcmask 883712
        %v323 = vsel %vm322, %v317, %v319
        %v324 = vsel %vm322, %v319, %v321
        %328 = vrot.lane.b32.xlu0 %v261, 92
        %v329 = vpop.permute.xlu0 %328
        %330 = vrot.lane.b32.xlu0 %v262, 92
        %v331 = vpop.permute.xlu0 %330
        %332 = vrot.lane.b32.xlu0 %v263, 92
        %v333 = vpop.permute.xlu0 %332
        %vm334 = vcmask 752640
        %v335 = vsel %vm334, %v329, %v331
        %v336 = vsel %vm334, %v331, %v333
        %340 = vrot.lane.b32.xlu0 %v261, 91
        %v341 = vpop.permute.xlu0 %340
        %342 = vrot.lane.b32.xlu0 %v262, 91
        %v343 = vpop.permute.xlu0 %342
        %344 = vrot.lane.b32.xlu0 %v263, 91
        %v345 = vpop.permute.xlu0 %344
        %vm346 = vcmask 744448
        %v347 = vsel %vm346, %v341, %v343
        %v348 = vsel %vm346, %v343, %v345
        %352 = vrot.lane.b32.xlu0 %v261, 90
        %v353 = vpop.permute.xlu0 %352
        %354 = vrot.lane.b32.xlu0 %v262, 90
        %v355 = vpop.permute.xlu0 %354
        %356 = vrot.lane.b32.xlu0 %v263, 90
        %v357 = vpop.permute.xlu0 %356
        %vm358 = vcmask 736256
        %v359 = vsel %vm358, %v353, %v355
        %v360 = vsel %vm358, %v355, %v357
        %vm364 = vcmask 588800
        %v366 = vsel %vm364, %v264, 0
        %368 = vmatpush.msra.mxu0 0.0
        %369 = vmatpush.msra.mxu0 0.0
        %370 = vmatpush.msra.mxu0 0.0
        %371 = vmatpush.msra.mxu0 0.0
        %372 = vmatpush.msra.mxu0 0.0
        %373 = vmatpush.msra.mxu0 0.0
        %374 = vmatpush.msra.mxu0 0.0
        %375 = vmatpush.msra.mxu0 %v359
        %376 = vmatpush.msra.mxu0 %v347
        %377 = vmatpush.msra.mxu0 %v335
        %378 = vmatpush.msra.mxu0 %v323
        %379 = vmatpush.msra.mxu0 %v311
        %380 = vmatpush.msra.mxu0 %v299
        %381 = vmatpush.msra.mxu0 %v287
        %382 = vmatpush.msra.mxu0 %v275
        %383 = vmatpush.msra.mxu0 %v261
        %384 = vmatmul.f32.gmra.mxu0 %v366
        %v385 = vpop.f32.mrf.mxu0
        %v386 = vadd.f32 0.0, %v385
        %387 = vdwg.mxu0
        %388 = vmatpush.msra.mxu0 0.0
        %389 = vmatpush.msra.mxu0 0.0
        %390 = vmatpush.msra.mxu0 0.0
        %391 = vmatpush.msra.mxu0 0.0
        %392 = vmatpush.msra.mxu0 0.0
        %393 = vmatpush.msra.mxu0 0.0
        %394 = vmatpush.msra.mxu0 0.0
        %395 = vmatpush.msra.mxu0 %v360
        %396 = vmatpush.msra.mxu0 %v348
        %397 = vmatpush.msra.mxu0 %v336
        %398 = vmatpush.msra.mxu0 %v324
        %399 = vmatpush.msra.mxu0 %v312
        %400 = vmatpush.msra.mxu0 %v300
        %401 = vmatpush.msra.mxu0 %v288
        %402 = vmatpush.msra.mxu0 %v276
        %403 = vmatpush.msra.mxu0 %v262
        %404 = vmatmul.f32.gmra.mxu0 %v366
        %v405 = vpop.f32.mrf.mxu0
        %v406 = vadd.f32 0.0, %v405
        %407 = vdwg.mxu0
        %408 = vmatpush.msra.mxu0 0.0
        %409 = vmatpush.msra.mxu0 0.0
        %410 = vmatpush.msra.mxu0 0.0
        %411 = vmatpush.msra.mxu0 0.0
        %412 = vmatpush.msra.mxu0 0.0
        %413 = vmatpush.msra.mxu0 0.0
        %414 = vmatpush.msra.mxu0 0.0
        %415 = vmatpush.msra.mxu0 %v357
        %416 = vmatpush.msra.mxu0 %v345
        %417 = vmatpush.msra.mxu0 %v333
        %418 = vmatpush.msra.mxu0 %v321
        %419 = vmatpush.msra.mxu0 %v309
        %420 = vmatpush.msra.mxu0 %v297
        %421 = vmatpush.msra.mxu0 %v285
        %422 = vmatpush.msra.mxu0 %v273
        %423 = vmatpush.msra.mxu0 %v263
        %424 = vmatmul.f32.gmra.mxu0 %v366
        %v425 = vpop.f32.mrf.mxu0
        %v426 = vadd.f32 0.0, %v425
        %427 = vdwg.mxu0
        %v429 = vperm.slane %v260, 0
        %v430 = vperm.slane %v260, 1
        %v431 = vperm.slane %v260, 2
        %v435 = vmul.f32 %v386, %v429
        %v436 = vmul.f32 %v406, %v430
        %v437 = vmul.f32 %v426, %v431
        %v438 = vadd.f32 %v435, %v436
        %vm439 = vcmask 261120
        %v440 = vsel %vm439, %v437, 0.0
        %v441 = vadd.f32 %v438, %v440
        %442 = vadd.xlane.f32.xlu0 %v441
        %v443 = vpop.xlane.xlu0 %442
        %v444 = vmul.f32 %v443, 0.00390625
        %v445 = vmul.f32 %v386, %v386
        %v446 = vmul.f32 %v406, %v406
        %v447 = vmul.f32 %v426, %v426
        %v448 = vmul.f32 %v445, %v429
        %v449 = vmul.f32 %v446, %v430
        %v450 = vmul.f32 %v447, %v431
        %v451 = vadd.f32 %v448, %v449
        %v452 = vsel %vm439, %v450, 0.0
        %v453 = vadd.f32 %v451, %v452
        %454 = vadd.xlane.f32.xlu0 %v453
        %v455 = vpop.xlane.xlu0 %454
        %v456 = vmul.f32 %v455, 0.00390625
        %v457 = vmul.f32 %v444, %v444
        %v458 = vsub.f32 %v456, %v457
        %v459 = vmax.f32 %v458, 0.0
        %v460 = vsub.f32 %v386, %v444
        %v461 = vsub.f32 %v406, %v444
        %v462 = vsub.f32 %v426, %v444
        %v463 = vadd.f32 %v459, 1e-05
        %v464 = vrsqrt.pop %v463
        %v465 = vmul.f32 %v464, %v463
        %v466 = vmul.f32 %v465, %v464
        %v467 = vmul.f32 0.5, %v466
        %v468 = vsub.f32 1.5, %v467
        %v469 = vmul.f32 %v464, %v468
        %vm470 = vweird.f32 %v463
        %vm471 = vweird.f32 %v464
        %vm472 = vmor %vm470, %vm471
        %v473 = vsel %vm472, %v464, %v469
        %v474 = vmul.f32 %v460, %v473
        %v475 = vmul.f32 %v461, %v473
        %v476 = vmul.f32 %v462, %v473
        %vm477 = vcmp.ge.f32.partialorder %v474, 0.0
        %vm478 = vcmp.ge.f32.partialorder %v475, 0.0
        %vm479 = vcmp.ge.f32.partialorder %v476, 0.0
        %v480 = vmul.f32 %v474, 0.01
        %v481 = vmul.f32 %v475, 0.01
        %v482 = vmul.f32 %v476, 0.01
        %v483 = vsel %vm477, %v474, %v480
        %v484 = vsel %vm478, %v475, %v481
        %v485 = vsel %vm479, %v476, %v482
        %v486 = vmul.f32 %v483, %v429
        %v487 = vmul.f32 %v484, %v430
        %v488 = vmul.f32 %v485, %v431
        %vm489 = vcmask 154624
        %490 = vst.msk [vmem:[#allocation2] sm:$0xff] %vm489, 0.0
        %vm491 = vcmask 572824
        %492 = vst.msk [vmem:[#allocation2 + $0x10] sm:$0xff] %vm491, 0.0
        %496 = vrot.lane.b32.xlu0 %v486, 19
        %v497 = vpop.permute.xlu0 %496
        %498 = vrot.lane.b32.xlu0 %v487, 19
        %v499 = vpop.permute.xlu0 %498
        %500 = vrot.lane.b32.xlu0 %v488, 19
        %v501 = vpop.permute.xlu0 %500
        %v502 = vsel %vm489, %v497, %v499
        %v503 = vsel %vm489, %v499, %v501
        %vm507 = vcmask 1047704
        %508 = vst.msk [vmem:[#allocation2] sm:$0xff] %vm507, %v497
        %509 = vst [vmem:[#allocation2 + $0x8] sm:$0xff] %v502
        %vm510 = vcmask 416768
        %511 = vst.msk [vmem:[#allocation2 + $0x10] sm:$0xff] %vm510, %v503
        %v512 = vld [vmem:[#allocation2] sm:$0xff]
        %v513 = vld [vmem:[#allocation2 + $0x8] sm:$0xff]
        %v514 = vld [vmem:[#allocation2 + $0x10] sm:$0xff]
        %v515 = vld [vmem:[#allocation8] sm:$0xf]
        %519 = vrot.lane.b32.xlu0 %v512, 127
        %v520 = vpop.permute.xlu0 %519
        %521 = vrot.lane.b32.xlu0 %v513, 127
        %v522 = vpop.permute.xlu0 %521
        %523 = vrot.lane.b32.xlu0 %v514, 127
        %v524 = vpop.permute.xlu0 %523
        %v525 = vsel %vm274, %v520, %v522
        %v526 = vsel %vm274, %v522, %v524
        %530 = vrot.lane.b32.xlu0 %v512, 126
        %v531 = vpop.permute.xlu0 %530
        %532 = vrot.lane.b32.xlu0 %v513, 126
        %v533 = vpop.permute.xlu0 %532
        %534 = vrot.lane.b32.xlu0 %v514, 126
        %v535 = vpop.permute.xlu0 %534
        %v536 = vsel %vm286, %v531, %v533
        %v537 = vsel %vm286, %v533, %v535
        %541 = vrot.lane.b32.xlu0 %v512, 110
        %v542 = vpop.permute.xlu0 %541
        %543 = vrot.lane.b32.xlu0 %v513, 110
        %v544 = vpop.permute.xlu0 %543
        %545 = vrot.lane.b32.xlu0 %v514, 110
        %v546 = vpop.permute.xlu0 %545
        %v547 = vsel %vm298, %v542, %v544
        %v548 = vsel %vm298, %v544, %v546
        %552 = vrot.lane.b32.xlu0 %v512, 109
        %v553 = vpop.permute.xlu0 %552
        %554 = vrot.lane.b32.xlu0 %v513, 109
        %v555 = vpop.permute.xlu0 %554
        %556 = vrot.lane.b32.xlu0 %v514, 109
        %v557 = vpop.permute.xlu0 %556
        %v558 = vsel %vm310, %v553, %v555
        %v559 = vsel %vm310, %v555, %v557
        %563 = vrot.lane.b32.xlu0 %v512, 108
        %v564 = vpop.permute.xlu0 %563
        %565 = vrot.lane.b32.xlu0 %v513, 108
        %v566 = vpop.permute.xlu0 %565
        %567 = vrot.lane.b32.xlu0 %v514, 108
        %v568 = vpop.permute.xlu0 %567
        %v569 = vsel %vm322, %v564, %v566
        %v570 = vsel %vm322, %v566, %v568
        %574 = vrot.lane.b32.xlu0 %v512, 92
        %v575 = vpop.permute.xlu0 %574
        %576 = vrot.lane.b32.xlu0 %v513, 92
        %v577 = vpop.permute.xlu0 %576
        %578 = vrot.lane.b32.xlu0 %v514, 92
        %v579 = vpop.permute.xlu0 %578
        %v580 = vsel %vm334, %v575, %v577
        %v581 = vsel %vm334, %v577, %v579
        %585 = vrot.lane.b32.xlu0 %v512, 91
        %v586 = vpop.permute.xlu0 %585
        %587 = vrot.lane.b32.xlu0 %v513, 91
        %v588 = vpop.permute.xlu0 %587
        %589 = vrot.lane.b32.xlu0 %v514, 91
        %v590 = vpop.permute.xlu0 %589
        %v591 = vsel %vm346, %v586, %v588
        %v592 = vsel %vm346, %v588, %v590
        %596 = vrot.lane.b32.xlu0 %v512, 90
        %v597 = vpop.permute.xlu0 %596
        %598 = vrot.lane.b32.xlu0 %v513, 90
        %v599 = vpop.permute.xlu0 %598
        %600 = vrot.lane.b32.xlu0 %v514, 90
        %v601 = vpop.permute.xlu0 %600
        %v602 = vsel %vm358, %v597, %v599
        %v603 = vsel %vm358, %v599, %v601
        %v608 = vsel %vm364, %v515, 0
        %610 = vmatpush.msra.mxu0 0.0
        %611 = vmatpush.msra.mxu0 0.0
        %612 = vmatpush.msra.mxu0 0.0
        %613 = vmatpush.msra.mxu0 0.0
        %614 = vmatpush.msra.mxu0 0.0
        %615 = vmatpush.msra.mxu0 0.0
        %616 = vmatpush.msra.mxu0 0.0
        %617 = vmatpush.msra.mxu0 %v602
        %618 = vmatpush.msra.mxu0 %v591
        %619 = vmatpush.msra.mxu0 %v580
        %620 = vmatpush.msra.mxu0 %v569
        %621 = vmatpush.msra.mxu0 %v558
        %622 = vmatpush.msra.mxu0 %v547
        %623 = vmatpush.msra.mxu0 %v536
        %624 = vmatpush.msra.mxu0 %v525
        %625 = vmatpush.msra.mxu0 %v512
        %626 = vmatmul.f32.gmra.mxu0 %v608
        %v627 = vpop.f32.mrf.mxu0
        %v628 = vadd.f32 0.0, %v627
        %629 = vdwg.mxu0
        %630 = vmatpush.msra.mxu0 0.0
        %631 = vmatpush.msra.mxu0 0.0
        %632 = vmatpush.msra.mxu0 0.0
        %633 = vmatpush.msra.mxu0 0.0
        %634 = vmatpush.msra.mxu0 0.0
        %635 = vmatpush.msra.mxu0 0.0
        %636 = vmatpush.msra.mxu0 0.0
        %637 = vmatpush.msra.mxu0 %v603
        %638 = vmatpush.msra.mxu0 %v592
        %639 = vmatpush.msra.mxu0 %v581
        %640 = vmatpush.msra.mxu0 %v570
        %641 = vmatpush.msra.mxu0 %v559
        %642 = vmatpush.msra.mxu0 %v548
        %643 = vmatpush.msra.mxu0 %v537
        %644 = vmatpush.msra.mxu0 %v526
        %645 = vmatpush.msra.mxu0 %v513
        %646 = vmatmul.f32.gmra.mxu0 %v608
        %v647 = vpop.f32.mrf.mxu0
        %v648 = vadd.f32 0.0, %v647
        %649 = vdwg.mxu0
        %650 = vmatpush.msra.mxu0 0.0
        %651 = vmatpush.msra.mxu0 0.0
        %652 = vmatpush.msra.mxu0 0.0
        %653 = vmatpush.msra.mxu0 0.0
        %654 = vmatpush.msra.mxu0 0.0
        %655 = vmatpush.msra.mxu0 0.0
        %656 = vmatpush.msra.mxu0 0.0
        %657 = vmatpush.msra.mxu0 %v601
        %658 = vmatpush.msra.mxu0 %v590
        %659 = vmatpush.msra.mxu0 %v579
        %660 = vmatpush.msra.mxu0 %v568
        %661 = vmatpush.msra.mxu0 %v557
        %662 = vmatpush.msra.mxu0 %v546
        %663 = vmatpush.msra.mxu0 %v535
        %664 = vmatpush.msra.mxu0 %v524
        %665 = vmatpush.msra.mxu0 %v514
        %666 = vmatmul.f32.gmra.mxu0 %v608
        %v667 = vpop.f32.mrf.mxu0
        %v668 = vadd.f32 0.0, %v667
        %669 = vdwg.mxu0
        %v670 = vmul.f32 %v628, %v429
        %v671 = vmul.f32 %v648, %v430
        %v672 = vmul.f32 %v668, %v431
        %vm673 = vcmask 1043456
        %v674 = vsel %vm673, %v670, 0.0
        %v675 = vsel %vm673, %v671, 0.0
        %v676 = vadd.f32 %v674, %v675
        %vm677 = vcmask 257024
        %v678 = vsel %vm677, %v672, 0.0
        %v679 = vadd.f32 %v676, %v678
        %680 = vadd.xlane.f32.xlu0 %v679
        %v681 = vpop.xlane.xlu0 %680
        %v682 = vmul.f32 %v681, 0.00390625
        %v683 = vmul.f32 %v628, %v628
        %v684 = vmul.f32 %v648, %v648
        %v685 = vmul.f32 %v668, %v668
        %v686 = vmul.f32 %v683, %v429
        %v687 = vmul.f32 %v684, %v430
        %v688 = vmul.f32 %v685, %v431
        %v689 = vsel %vm673, %v686, 0.0
        %v690 = vsel %vm673, %v687, 0.0
        %v691 = vadd.f32 %v689, %v690
        %v692 = vsel %vm677, %v688, 0.0
        %v693 = vadd.f32 %v691, %v692
        %694 = vadd.xlane.f32.xlu0 %v693
        %v695 = vpop.xlane.xlu0 %694
        %v696 = vmul.f32 %v695, 0.00390625
        %v697 = vmul.f32 %v682, %v682
        %v698 = vsub.f32 %v696, %v697
        %v699 = vmax.f32 %v698, 0.0
        %v700 = vsub.f32 %v628, %v682
        %v701 = vsub.f32 %v648, %v682
        %v702 = vsub.f32 %v668, %v682
        %v703 = vadd.f32 %v699, 1e-05
        %v704 = vrsqrt.pop %v703
        %v705 = vmul.f32 %v704, %v703
        %v706 = vmul.f32 %v705, %v704
        %v707 = vmul.f32 0.5, %v706
        %v708 = vsub.f32 1.5, %v707
        %v709 = vmul.f32 %v704, %v708
        %vm710 = vweird.f32 %v703
        %vm711 = vweird.f32 %v704
        %vm712 = vmor %vm710, %vm711
        %v713 = vsel %vm712, %v704, %v709
        %v714 = vmul.f32 %v700, %v713
        %v715 = vmul.f32 %v701, %v713
        %v716 = vmul.f32 %v702, %v713
        %vm717 = vcmp.ge.f32.partialorder %v714, 0.0
        %vm718 = vcmp.ge.f32.partialorder %v715, 0.0
        %vm719 = vcmp.ge.f32.partialorder %v716, 0.0
        %v720 = vmul.f32 %v714, 0.01
        %v721 = vmul.f32 %v715, 0.01
        %v722 = vmul.f32 %v716, 0.01
        %v723 = vsel %vm717, %v714, %v720
        %v724 = vsel %vm718, %v715, %v721
        %v725 = vsel %vm719, %v716, %v722
        %v726 = vmul.f32 %v723, %v429
        %v727 = vmul.f32 %v724, %v430
        %v728 = vmul.f32 %v725, %v431
        %v731 = vrot.slane %v727, 4
        %v732 = vsel %vm673, %v726, %v731
        %734 = vst [vmem:[%s259] sm:$0xff] %v732
        %735 = vst.msk [vmem:[%s259 + $0x8] sm:$0xf] %vm677, %v728
        %s736 = sand.u32 %s120, 1
        %s737 = scalar_lea.sflag [#allocation5], %s736
        %s738 = sand.u32 %s120, 1
        %s739 = smul.addr %s738, 12
        %s740 = scalar_lea.vmem [#allocation11], %s739
        // Predicated region
        $region53: #{tpu_custom_call.1} parent=35 // pred_check
          %p741 = pneg %p130
        $region54: #{tpu_custom_call.1} parent=35 // pred_check_branch
          %743 = sbr.rel (%p741) target = $region56
        $region55: #{tpu_custom_call.1} parent=35 // pred_region
          %745 = vsyncadd %s737, 0
          %s746 = smul.addr %s23, 3
          %s747 = smul.addr %s746, 4
          %s748 = scalar_lea.hbm %s4, %s747
          %s750 = sshll.u32 %s740, 4
          %s751 = int_to_ptr.vmem [resolvable:$true] %s750
          %s752 = sshll.u32 %s748, 4
          %s753 = int_to_ptr.hbm [resolvable:$true] %s752
          %755 = dma.vmem_to_hbm [thread:$0]  %s751, 192, %s753, %s737
        $region56: #{tpu_custom_call.1} parent=35 // pred_fallthru
          _
      $region36: #{tpu_custom_call.1} parent=5 // pred_fallthru
        _
      %p756 = scmp.le.s32.totalorder 2, %s18
      // Predicated region
      $region57: #{tpu_custom_call.1} parent=5 // pred_check
        %p757 = pneg %p756
      $region58: #{tpu_custom_call.1} parent=5 // pred_check_branch
        %759 = sbr.rel (%p757) target = $region60
      $region59: #{tpu_custom_call.1} parent=5 // pred_region
        %s760 = ssub.s32 %s18, 2
        // Predicated region
        $region61: #{tpu_custom_call.1} parent=59 // pred_check
          %p761 = pneg %p136
        $region62: #{tpu_custom_call.1} parent=59 // pred_check_branch
          %763 = sbr.rel (%p761) target = $region64
        $region63: #{tpu_custom_call.1} parent=59 // pred_region
          %s764 = sand.u32 %s121, 1
          %s765 = scalar_lea.sflag [#allocation5], %s764
          %s766 = sand.u32 %s121, 1
          %s767 = smul.addr %s766, 12
          %s768 = scalar_lea.vmem [#allocation11], %s767
          %770 = dma.done %s765, 192
        $region64: #{tpu_custom_call.1} parent=59 // pred_fallthru
          _
      $region60: #{tpu_custom_call.1} parent=5 // pred_fallthru
        _
    $region6: #{tpu_custom_call.1} parent=1 // loop_footer
      %s22 = sadd.s32 1, %s18
    $region7: #{tpu_custom_call.1} parent=1 // loop_footer_branch
      %17 = sbr.rel target = $region3
    $region8: #{tpu_custom_call.1} parent=1 // loop_exit
      _
    %771 = vsyncpa [#allocation4], 1
    %s772 = scalar_lea.sflag [#allocation4], 1
    %773 = vsyncpa %s772, 1
    %774 = vsyncpa [#allocation7], 1
    %775 = vsyncpa [#allocation10], 1
    %776 = vsyncpa [#allocation5], 1
    %s777 = scalar_lea.sflag [#allocation5], 1
    %778 = vsyncpa %s777, 1

</llo_original>
